<compile_context>
chip_gen: v5e
topology: v5e:2x2
jax: 0.10.0
libtpu: 0.0.40
codegen_flags: <defaults>
</compile_context>

<pallas_src>
import jax
import jax.numpy as jnp
from jax import lax
from jax.experimental import pallas as pl
from jax.experimental.pallas import tpu as pltpu

_LANES = 128


def _make_tv_kernel(*, nc, hw, w, tc, ch, ragged, use_xlu_roll):
    """Build the TV kernel for static geometry (all arguments are Python ints/bools)."""
    n_chunks = tc // ch
    shift_w = (hw - 1) % hw          # rolled[i] = x[i + 1]  (next column)
    shift_h = (hw - w) % hw          # rolled[i] = x[i + w]  (next image row)

    def _shift(a, s):
        # jnp.roll semantics: out[:, i] = a[:, (i - s) % hw]
        if s == 0:
            return a
        if use_xlu_roll:
            return pltpu.roll(a, shift=s, axis=1)      # XLU slot, no shifted VMEM copy
        return jnp.concatenate([a[:, hw - s:], a[:, :hw - s]], axis=1)

    def kernel(x_ref, h_ref, w_ref):
        blk_row0 = pl.program_id(0) * tc

        # Loop-invariant masks, built once per grid step (hoisted out of the chunk loop).
        lane = lax.broadcasted_iota(jnp.int32, (ch, hw), 1)
        w_mask = ((lane % w) != (w - 1)).astype(jnp.float32)   # last column: no W-diff
        h_mask = (lane < (hw - w)).astype(jnp.float32)         # last row:    no H-diff

        def chunk_sums(ci, carry):
            h_acc, w_acc = carry
            base = pl.multiple_of(ci * ch, ch)
            xc = x_ref[pl.ds(base, ch), :].astype(jnp.float32)         # (ch, hw)
            if ragged:
                # Rows past the true channel count are uninitialized padding
                # (OOB reads are NOT zero-filled) -> zero them out.
                rows = blk_row0 + base + lax.broadcasted_iota(jnp.int32, (ch, 1), 0)
                xc = jnp.where(rows < nc, xc, 0.0)
            dw = (_shift(xc, shift_w) - xc) * w_mask                   # x[i+1] - x[i]
            dh = (_shift(xc, shift_h) - xc) * h_mask                   # x[i+w] - x[i]
            return (h_acc + jnp.sum(dh * dh), w_acc + jnp.sum(dw * dw))

        zero = jnp.float32(0.0)
        h_sum, w_sum = lax.fori_loop(0, n_chunks, chunk_sums, (zero, zero),
                                     unroll=min(n_chunks, 8))

        # Lane-dense partial-sum outputs: one (1, 128) row per grid step.
        h_ref[...] = jnp.full((1, _LANES), h_sum, dtype=jnp.float32)
        w_ref[...] = jnp.full((1, _LANES), w_sum, dtype=jnp.float32)

    return kernel


def tv_loss(x, tv_loss_weight: float = 1.0, *, target_block_bytes: int = 4 * 1024 * 1024):
    """Exact equivalent of TVLoss.forward for NCHW input x."""
    n, c, h, w = x.shape
    nc = n * c
    hw = h * w

    # Contiguous NCHW -> (nc, hw) is a free reshape; flattened image axis is lane-dense.
    x_flat = x.reshape(nc, hw)

    f32 = 4                                   # kernel computes in f32 regardless of input dtype
    slab_f32 = hw * f32

    # ---- block (grid-step) height along the channel axis, budgeted in f32 bytes ----
    rows = max(1, int(target_block_bytes) // slab_f32)
    if nc >= 16:
        # Keep the grid >= 2 steps so both TensorCores participate on v7x.
        rows = min(rows, max(8, ((nc // 2) // 8) * 8))
    if rows >= nc:
        tc = nc
    else:
        tc = max(8, (rows // 8) * 8)          # sublane (8) tiling constraint
        if tc >= nc:
            tc = nc

    # ---- in-kernel chunk height: multiple of 8 dividing tc, ~<= 256 KiB f32 ----
    if tc % 8 == 0:
        ch = 8
        while ch * 2 <= tc and tc % (ch * 2) == 0 and (ch * 2) * slab_f32 <= 256 * 1024:
            ch *= 2
    else:
        ch = tc                               # tiny tensors: one chunk = whole block

    num_blocks = pl.cdiv(nc, tc)
    ragged = (nc % tc) != 0
    use_xlu_roll = (hw % _LANES == 0)

    kernel = _make_tv_kernel(nc=nc, hw=hw, w=w, tc=tc, ch=ch,
                             ragged=ragged, use_xlu_roll=use_xlu_roll)

    # VMEM budget: double-buffered input block + f32 per-chunk working set (+ margin).
    in_block = tc * hw * x.dtype.itemsize
    work = 10 * ch * hw * f32
    vmem_limit = int(min(48 * 1024 * 1024,
                         max(32 * 1024 * 1024, 2 * in_block + work + (2 << 20))))

    h_parts, w_parts = pl.pallas_call(
        kernel,
        out_shape=(jax.ShapeDtypeStruct((num_blocks, _LANES), jnp.float32),
                   jax.ShapeDtypeStruct((num_blocks, _LANES), jnp.float32)),
        grid_spec=pltpu.PrefetchScalarGridSpec(
            num_scalar_prefetch=0,
            grid=(num_blocks,),
            in_specs=[pl.BlockSpec((tc, hw), lambda i: (i, 0))],
            out_specs=[pl.BlockSpec((1, _LANES), lambda i: (i, 0)),
                       pl.BlockSpec((1, _LANES), lambda i: (i, 0))],
        ),
        compiler_params=pltpu.CompilerParams(
            dimension_semantics=("parallel",),
            vmem_limit_bytes=vmem_limit,
        ),
    )(x_flat)

    # Tiny final reduction + normalization in plain JAX.
    h_tv = jnp.sum(h_parts[:, 0])
    w_tv = jnp.sum(w_parts[:, 0])

    # Matches TVLoss._tensor_size; like the PyTorch module, h == 1 or w == 1
    # divides by zero.
    count_h = c * (h - 1) * w
    count_w = c * h * (w - 1)
    return tv_loss_weight * 2.0 * (h_tv / count_h + w_tv / count_w) / n


def tv_loss_ref(x, tv_loss_weight: float = 1.0):
    """Pure-JAX reference mirroring the PyTorch module."""
    n, c, h, w = x.shape
    xf = x.astype(jnp.float32)
    h_tv = jnp.sum((xf[:, :, 1:, :] - xf[:, :, : h - 1, :]) ** 2)
    w_tv = jnp.sum((xf[:, :, :, 1:] - xf[:, :, :, : w - 1]) ** 2)
    count_h = c * (h - 1) * w
    count_w = c * h * (w - 1)
    return tv_loss_weight * 2.0 * (h_tv / count_h + w_tv / count_w) / n


if __name__ == "__main__":
    key = jax.random.PRNGKey(0)
    # NCHW, small shapes consistent with the module's expectations.
    x = jax.random.normal(key, (2, 4, 16, 16), dtype=jnp.float32)

    out = jax.block_until_ready(tv_loss(x, tv_loss_weight=1.0))
    ref = jax.block_until_ready(tv_loss_ref(x, tv_loss_weight=1.0))
    assert jnp.allclose(out, ref, rtol=1e-5, atol=1e-5), (out, ref)

    print("KERNEL_OK")
</pallas_src>

<mosaic_0001>
module attributes {stable_mosaic.version = 11 : i64} {
  func.func @kernel(%arg0: i32, %arg1: memref<8x256xf32, #tpu.memory_space<vmem>>, %arg2: memref<1x128xf32, #tpu.memory_space<vmem>>, %arg3: memref<1x128xf32, #tpu.memory_space<vmem>>) attributes {dimension_semantics = [#tpu.dimension_semantics<parallel>], iteration_bounds = array<i64: 1>, scalar_prefetch = 0 : i64, scratch_operands = 0 : i64, tpu.core_type = #tpu.core_type<tc>, window_params = [{transform_indices = @transform_0, window_bounds = array<i64: 8, 256>}, {transform_indices = @transform_1, window_bounds = array<i64: 1, 128>}, {transform_indices = @transform_2, window_bounds = array<i64: 1, 128>}]} {
    %0 = tpu.iota {dimensions = array<i32: 1>} : vector<8x256xi32>
    %c16_i32 = arith.constant 16 : i32
    %c0_i32 = arith.constant 0 : i32
    %1 = arith.cmpi eq, %c16_i32, %c0_i32 : i32
    %c1_i32 = arith.constant 1 : i32
    %2 = arith.select %1, %c1_i32, %c16_i32 : i32
    %3 = vector.broadcast %2 : i32 to vector<8x256xi32>
    %4 = arith.remsi %0, %3 : vector<8x256xi32>
    %c0_i32_0 = arith.constant 0 : i32
    %5 = vector.broadcast %c0_i32_0 : i32 to vector<8x256xi32>
    %6 = arith.cmpi ne, %4, %5 : vector<8x256xi32>
    %c0_i32_1 = arith.constant 0 : i32
    %7 = vector.broadcast %c0_i32_1 : i32 to vector<8x256xi32>
    %8 = arith.cmpi slt, %4, %7 : vector<8x256xi32>
    %c0_i32_2 = arith.constant 0 : i32
    %9 = arith.cmpi slt, %2, %c0_i32_2 : i32
    %10 = vector.broadcast %9 : i1 to vector<8x256xi1>
    %11 = vector.broadcast %10 : vector<8x256xi1> to vector<8x256xi1>
    %12 = arith.xori %8, %11 : vector<8x256xi1>
    %13 = arith.andi %12, %6 : vector<8x256xi1>
    %14 = vector.broadcast %2 : i32 to vector<8x256xi32>
    %15 = arith.addi %4, %14 : vector<8x256xi32>
    %16 = arith.select %13, %15, %4 : vector<8x256xi1>, vector<8x256xi32>
    %c15_i32 = arith.constant 15 : i32
    %17 = vector.broadcast %c15_i32 : i32 to vector<8x256xi32>
    %18 = arith.cmpi ne, %16, %17 : vector<8x256xi32>
    %19 = arith.extui %18 : vector<8x256xi1> to vector<8x256xi32>
    %20 = arith.sitofp %19 : vector<8x256xi32> to vector<8x256xf32>
    %c240_i32 = arith.constant 240 : i32
    %21 = vector.broadcast %c240_i32 : i32 to vector<8x256xi32>
    %22 = arith.cmpi slt, %0, %21 : vector<8x256xi32>
    %23 = arith.extui %22 : vector<8x256xi1> to vector<8x256xi32>
    %24 = arith.sitofp %23 : vector<8x256xi32> to vector<8x256xf32>
    %cst = arith.constant 0.000000e+00 : f32
    %cst_3 = arith.constant 0.000000e+00 : f32
    %c0_i32_4 = arith.constant 0 : i32
    %c8_i32 = arith.constant 8 : i32
    %25 = arith.muli %c0_i32_4, %c8_i32 : i32
    %26 = tpu.assume_multiple %25, 8 : i32
    %27 = arith.index_cast %26 : i32 to index
    %c0 = arith.constant 0 : index
    %28 = vector.load %arg1[%27, %c0] : memref<8x256xf32, #tpu.memory_space<vmem>>, vector<8x256xf32>
    %c255_i32 = arith.constant 255 : i32
    %29 = tpu.dynamic_rotate %28 by %c255_i32 dim 1 : vector<8x256xf32>, i32 -> vector<8x256xf32>
    %30 = arith.subf %29, %28 : vector<8x256xf32>
    %31 = arith.mulf %30, %20 : vector<8x256xf32>
    %c240_i32_5 = arith.constant 240 : i32
    %32 = tpu.dynamic_rotate %28 by %c240_i32_5 dim 1 : vector<8x256xf32>, i32 -> vector<8x256xf32>
    %33 = arith.subf %32, %28 : vector<8x256xf32>
    %34 = arith.mulf %33, %24 : vector<8x256xf32>
    %35 = arith.mulf %34, %34 : vector<8x256xf32>
    %36 = vector.shape_cast %35 : vector<8x256xf32> to vector<1x8x256xf32>
    %cst_6 = arith.constant dense<0.000000e+00> : vector<1xf32>
    %37 = vector.multi_reduction <add>, %36, %cst_6 [1, 2] : vector<1x8x256xf32> to vector<1xf32>
    %38 = vector.shape_cast %37 : vector<1xf32> to vector<1x1x1xf32>
    %39 = vector.extract %38[0, 0, 0] : f32 from vector<1x1x1xf32>
    %40 = arith.addf %cst, %39 : f32
    %41 = arith.mulf %31, %31 : vector<8x256xf32>
    %42 = vector.shape_cast %41 : vector<8x256xf32> to vector<1x8x256xf32>
    %cst_7 = arith.constant dense<0.000000e+00> : vector<1xf32>
    %43 = vector.multi_reduction <add>, %42, %cst_7 [1, 2] : vector<1x8x256xf32> to vector<1xf32>
    %44 = vector.shape_cast %43 : vector<1xf32> to vector<1x1x1xf32>
    %45 = vector.extract %44[0, 0, 0] : f32 from vector<1x1x1xf32>
    %46 = arith.addf %cst_3, %45 : f32
    %c1_i32_8 = arith.constant 1 : i32
    %47 = vector.broadcast %40 : f32 to vector<1x128xf32>
    %c0_9 = arith.constant 0 : index
    %c0_10 = arith.constant 0 : index
    %48 = vector.load %arg2[%c0_9, %c0_10] : memref<1x128xf32, #tpu.memory_space<vmem>>, vector<1x128xf32>
    tpu.vector_store %arg2[%c0_9, %c0_10], %47 {strides = array<i32>} : memref<1x128xf32, #tpu.memory_space<vmem>>, vector<1x128xf32>,
    %49 = vector.broadcast %46 : f32 to vector<1x128xf32>
    %c0_11 = arith.constant 0 : index
    %c0_12 = arith.constant 0 : index
    %50 = vector.load %arg3[%c0_11, %c0_12] : memref<1x128xf32, #tpu.memory_space<vmem>>, vector<1x128xf32>
    tpu.vector_store %arg3[%c0_11, %c0_12], %49 {strides = array<i32>} : memref<1x128xf32, #tpu.memory_space<vmem>>, vector<1x128xf32>,
    return
  }
  func.func @transform_0(%arg0: i32) -> (i32, i32) {
    %c0_i32 = arith.constant 0 : i32
    %c0_i32_0 = arith.constant 0 : i32
    return %arg0, %c0_i32 : i32, i32
  }
  func.func @transform_1(%arg0: i32) -> (i32, i32) {
    %c0_i32 = arith.constant 0 : i32
    %c0_i32_0 = arith.constant 0 : i32
    return %arg0, %c0_i32 : i32, i32
  }
  func.func @transform_2(%arg0: i32) -> (i32, i32) {
    %c0_i32 = arith.constant 0 : i32
    %c0_i32_0 = arith.constant 0 : i32
    return %arg0, %c0_i32 : i32, i32
  }
}

</mosaic_0001>

<llo_original>
// kernel: tpu_custom_call.1
$region0: #{tpu_custom_call.1}
  #allocation0 [shape = 'u32[]', space=smem, size = 0x4, offset = 0x4, fixed_abs, tag = 'smem constant byte address 0x4 - core index']
  #allocation1 [shape = 'u32[72,128]{1,0:T(1,128)}', space=vmem, size = 0x9000, scoped, tag = 'internal scratch']
  %s0 = inlined_call_operand.hbm [shape: f32[8,256], index: 0, kind: input, shape index: {}]
  %s1 = inlined_call_operand.hbm [shape: f32[1,128], index: 1, kind: output, shape index: {0}]
  %s2 = inlined_call_operand.hbm [shape: f32[1,128], index: 2, kind: output, shape index: {1}]
  %3 = xla_tuple %s1, %s2
  %s4 = sld [smem:[#allocation0]]
  $region26: #{tpu_custom_call.1} parent=0
    _
  %s6 = ssub.s32 1, %s4
  %s7 = scalar_select 0, %s6, %s4
  $region1: #{tpu_custom_call.1} parent=0
    #allocation2 [shape = 'u8[8192]{0}', space=vmem, size = 0x2000, scoped, tag = 'input window, operand 0, single buffered']
    #allocation3 [shape = 's32[1]{0}', space=sflag, size = 0x4, scoped, tag = 'scoped memory for tpu_custom_call.1']
    #allocation4 [shape = 's32[1]{0}', space=sflag, size = 0x4, scoped, tag = 'scoped memory for tpu_custom_call.1']
    #allocation5 [shape = 'u8[512]{0}', space=vmem, size = 0x400, scoped, tag = 'output window, operand 0, single buffered']
    #allocation6 [shape = 'u8[512]{0}', space=vmem, size = 0x400, scoped, tag = 'output window, operand 1, single buffered']
    #allocation7 [shape = 's32[1]{0}', space=sflag, size = 0x4, scoped, tag = 'scoped memory for tpu_custom_call.1']
    %8 = vsyncpa [#allocation3], 0
    %9 = vsyncpa [#allocation4], 0
    %10 = vsyncpa [#allocation7], 0
    // Predicated region
    $region2: #{tpu_custom_call.1} parent=1 // pred_check
      _
    $region3: #{tpu_custom_call.1} parent=1 // pred_check_branch
      %12 = sbr.rel (0) target = $region5
    $region4: #{tpu_custom_call.1} parent=1 // pred_region
      %14 = vsyncadd [#allocation3], 0
      %s16 = sshll.u32 %s0, 4
      %s17 = int_to_ptr.hbm [resolvable:$true] %s16
      %s18 = sshll.u32 [#allocation2], 4
      %s19 = int_to_ptr.vmem [resolvable:$true] %s18
      %21 = dma.hbm_to_vmem [thread:$0]  %s17, 256, %s19, [#allocation3]
    $region5: #{tpu_custom_call.1} parent=1 // pred_fallthru
      _
    // Predicated region
    $region6: #{tpu_custom_call.1} parent=1 // pred_check
      _
    $region7: #{tpu_custom_call.1} parent=1 // pred_check_branch
      %23 = sbr.rel (0) target = $region9
    $region8: #{tpu_custom_call.1} parent=1 // pred_region
      %25 = dma.done [#allocation3], 256
    $region9: #{tpu_custom_call.1} parent=1 // pred_fallthru
      _
    %v26 = vlaneseq
    %v27 = vand.u32 %v26, 127
    %v28 = vadd.s32 %v27, 128
    %vm29 = vcmp.lt.s32.totalorder %v27, 0
    %v30 = vsub.s32 0, %v27
    %v31 = vsel %vm29, %v30, %v27
    %v32 = vshrl.u32 %v31, 4
    %v33 = vand.u32 %v31, 15
    %v34 = vsub.s32 0, %v33
    %v35 = vsel %vm29, %v34, %v33
    %vm36 = vcmp.lt.s32.totalorder %v28, 0
    %v37 = vsub.s32 0, %v28
    %v38 = vsel %vm36, %v37, %v28
    %v39 = vshrl.u32 %v38, 4
    %v40 = vand.u32 %v38, 15
    %v41 = vsub.s32 0, %v40
    %v42 = vsel %vm36, %v41, %v40
    %vm43 = vcmp.ne.s32.totalorder %v35, 0
    %vm44 = vcmp.ne.s32.totalorder %v42, 0
    %vm45 = vcmp.lt.s32.totalorder %v35, 0
    %vm46 = vcmp.lt.s32.totalorder %v42, 0
    %vm47 = vmand %vm45, %vm43
    %vm48 = vmand %vm46, %vm44
    %v49 = vadd.s32 %v35, 16
    %v50 = vadd.s32 %v42, 16
    %v51 = vsel %vm47, %v49, %v35
    %v52 = vsel %vm48, %v50, %v42
    %vm53 = vcmp.ne.s32.totalorder %v51, 15
    %vm54 = vcmp.ne.s32.totalorder %v52, 15
    %v55 = vsel %vm53, 1, 0
    %v56 = vsel %vm54, 1, 0
    %v57 = vcvt.s32.f32 %v55
    %v58 = vcvt.s32.f32 %v56
    %vm59 = vcmp.lt.s32.totalorder %v27, 240
    %vm60 = vcmp.lt.s32.totalorder %v28, 240
    %v61 = vsel %vm59, 1, 0
    %v62 = vsel %vm60, 1, 0
    %v63 = vcvt.s32.f32 %v61
    %v64 = vcvt.s32.f32 %v62
    %s65 = smul.u32 0, 2
    %s66 = smul.addr %s65, 8
    %s67 = scalar_lea.vmem [#allocation2], %s66
    %v68 = vld [vmem:[%s67] sm:$0xff]
    %v69 = vld [vmem:[%s67 + $0x8] sm:$0xff]
    %70 = vrot.lane.b32.xlu0 %v68, 127
    %v71 = vpop.permute.xlu0 %70
    %72 = vrot.lane.b32.xlu0 %v69, 127
    %v73 = vpop.permute.xlu0 %72
    %vm74 = vcmp.lt.s32.totalorder %v27, 127
    %v75 = vsel %vm74, %v71, %v73
    %v76 = vsel %vm74, %v73, %v71
    %v77 = vsub.f32 %v75, %v68
    %v78 = vsub.f32 %v76, %v69
    %v79 = vmul.f32 %v77, %v57
    %v80 = vmul.f32 %v78, %v58
    %81 = vrot.lane.b32.xlu0 %v68, 112
    %v82 = vpop.permute.xlu0 %81
    %83 = vrot.lane.b32.xlu0 %v69, 112
    %v84 = vpop.permute.xlu0 %83
    %vm85 = vcmp.lt.s32.totalorder %v27, 112
    %v86 = vsel %vm85, %v82, %v84
    %v87 = vsel %vm85, %v84, %v82
    %v88 = vsub.f32 %v86, %v68
    %v89 = vsub.f32 %v87, %v69
    %v90 = vmul.f32 %v88, %v63
    %v91 = vmul.f32 %v89, %v64
    %v92 = vmul.f32 %v90, %v90
    %v93 = vmul.f32 %v91, %v91
    %v94 = vadd.f32 %v92, %v93
    %95 = vadd.xlane.f32.xlu0 %v94
    %v96 = vpop.xlane.xlu0 %95
    %v97 = vrot.slane %v96, 4
    %v98 = vadd.f32 %v96, %v97
    %v99 = vrot.slane %v98, 2
    %v100 = vadd.f32 %v98, %v99
    %v101 = vrot.slane %v100, 1
    %v102 = vadd.f32 %v100, %v101
    %s103 = vtos %v102
    %s104 = sadd.f32 %s103, 0.0
    %v105 = vmul.f32 %v79, %v79
    %v106 = vmul.f32 %v80, %v80
    %v107 = vadd.f32 %v105, %v106
    %108 = vadd.xlane.f32.xlu0 %v107
    %v109 = vpop.xlane.xlu0 %108
    %v110 = vrot.slane %v109, 4
    %v111 = vadd.f32 %v109, %v110
    %v112 = vrot.slane %v111, 2
    %v113 = vadd.f32 %v111, %v112
    %v114 = vrot.slane %v113, 1
    %v115 = vadd.f32 %v113, %v114
    %s116 = vtos %v115
    %s117 = sadd.f32 %s116, 0.0
    %v118 = vstv %s104
    %119 = vst [vmem:[#allocation5] sm:$0x1] %v118
    %v120 = vstv %s117
    %121 = vst [vmem:[#allocation6] sm:$0x1] %v120
    // Predicated region
    $region10: #{tpu_custom_call.1} parent=1 // pred_check
      _
    $region11: #{tpu_custom_call.1} parent=1 // pred_check_branch
      %123 = sbr.rel (0) target = $region13
    $region12: #{tpu_custom_call.1} parent=1 // pred_region
      %125 = vsyncadd [#allocation4], 0
      %s127 = sshll.u32 [#allocation5], 4
      %s128 = int_to_ptr.vmem [resolvable:$true] %s127
      %s129 = sshll.u32 %s1, 4
      %s130 = int_to_ptr.hbm [resolvable:$true] %s129
      %132 = dma.vmem_to_hbm [thread:$0]  %s128, 16, %s130, [#allocation4]
    $region13: #{tpu_custom_call.1} parent=1 // pred_fallthru
      _
    // Predicated region
    $region14: #{tpu_custom_call.1} parent=1 // pred_check
      _
    $region15: #{tpu_custom_call.1} parent=1 // pred_check_branch
      %134 = sbr.rel (0) target = $region17
    $region16: #{tpu_custom_call.1} parent=1 // pred_region
      %136 = vsyncadd [#allocation7], 0
      %s138 = sshll.u32 [#allocation6], 4
      %s139 = int_to_ptr.vmem [resolvable:$true] %s138
      %s140 = sshll.u32 %s2, 4
      %s141 = int_to_ptr.hbm [resolvable:$true] %s140
      %143 = dma.vmem_to_hbm [thread:$0]  %s139, 16, %s141, [#allocation7]
    $region17: #{tpu_custom_call.1} parent=1 // pred_fallthru
      _
    // Predicated region
    $region18: #{tpu_custom_call.1} parent=1 // pred_check
      _
    $region19: #{tpu_custom_call.1} parent=1 // pred_check_branch
      %145 = sbr.rel (0) target = $region21
    $region20: #{tpu_custom_call.1} parent=1 // pred_region
      %147 = dma.done [#allocation4], 16
    $region21: #{tpu_custom_call.1} parent=1 // pred_fallthru
      _
    // Predicated region
    $region22: #{tpu_custom_call.1} parent=1 // pred_check
      _
    $region23: #{tpu_custom_call.1} parent=1 // pred_check_branch
      %149 = sbr.rel (0) target = $region25
    $region24: #{tpu_custom_call.1} parent=1 // pred_region
      %151 = dma.done [#allocation7], 16
    $region25: #{tpu_custom_call.1} parent=1 // pred_fallthru
      _
    %152 = vsyncpa [#allocation3], 1
    %153 = vsyncpa [#allocation4], 1
    %154 = vsyncpa [#allocation7], 1

</llo_original>
